<compile_context>
chip_gen: v6e
topology: v6e:2x2x1
jax: 0.10.0
libtpu: 0.0.40
codegen_flags: <defaults>
</compile_context>

<pallas_src>
import math

import jax
import jax.numpy as jnp
from jax.experimental import pallas as pl
from jax.experimental.pallas import tpu as pltpu


def _round_up(n: int, m: int) -> int:
    return ((n + m - 1) // m) * m


def _round_down(n: int, m: int) -> int:
    return (n // m) * m


def _pos_enc_kernel(x_ref, tab_ref, o_ref):
    # x_ref / o_ref: one row-tile (block_s, d_model) in VMEM.
    # tab_ref: (2, d_model) f32, VMEM-resident across the whole grid:
    #   row 0 -> per-column inverse frequency (pairs of columns share a frequency)
    #   row 1 -> per-column phase: 0 for even columns, pi/2 for odd columns (sin -> cos)
    i = pl.program_id(0)
    block_s, _ = x_ref.shape

    # Absolute row index of this tile, shape (block_s, 1); column data stays at (1, d_model).
    pos = jax.lax.broadcasted_iota(jnp.int32, (block_s, 1), 0) + i * block_s
    inv_freq = tab_ref[0:1, :]          # (1, d_model)
    phase = tab_ref[1:2, :]             # (1, d_model)

    angle = pos.astype(jnp.float32) * inv_freq + phase   # broadcast to (block_s, d_model)
    enc = jnp.sin(angle)                                  # single transcendental / element

    o_ref[...] = (x_ref[...].astype(jnp.float32) + enc).astype(o_ref.dtype)


def position_encoding(x: jax.Array, block_s: int | None = None) -> jax.Array:
    """x: [seq_len, d_model] -> x + PE[:seq_len]  (same shape & dtype as x)."""
    seq_len, d_model = x.shape
    itemsize = jnp.dtype(x.dtype).itemsize
    # Minimum sublane tile for the dtype: 8 (f32), 16 (bf16), 32 (int8/fp8).
    sublane = max(8, 32 // max(1, itemsize))

    if block_s is None:
        # ~4 MiB per tile; with 2 input + 2 output buffers in flight that is ~16 MiB of VMEM,
        # comfortably inside v7x's 64 MiB physical VMEM and the raised scoped limit below.
        budget_bytes = 4 * 1024 * 1024
        rows = max(sublane, budget_bytes // max(1, d_model * itemsize))
        block_s = min(_round_up(seq_len, sublane), max(sublane, _round_down(rows, sublane)))
    block_s = max(sublane, _round_up(block_s, sublane))

    grid = (pl.cdiv(seq_len, block_s),)

    # Precompute the column-only table on host/XLA side: tiny ((2, d_model) f32) one-time HBM read.
    half = jnp.arange(0, d_model, 2, dtype=jnp.float32)
    inv_half = jnp.exp(half * jnp.float32(-math.log(10000.0) / d_model))
    inv_freq = jnp.repeat(inv_half, 2)[:d_model]                         # pairs share a frequency
    phase = (jnp.arange(d_model, dtype=jnp.int32) % 2).astype(jnp.float32) * jnp.float32(math.pi / 2.0)
    table = jnp.stack([inv_freq, phase], axis=0)                         # (2, d_model) f32

    return pl.pallas_call(
        _pos_enc_kernel,
        out_shape=jax.ShapeDtypeStruct((seq_len, d_model), x.dtype),
        grid_spec=pltpu.PrefetchScalarGridSpec(
            num_scalar_prefetch=0,
            grid=grid,
            in_specs=[
                pl.BlockSpec((block_s, d_model), lambda i: (i, 0)),   # x row-tile
                pl.BlockSpec((2, d_model), lambda i: (0, 0)),         # table, resident across grid
            ],
            out_specs=pl.BlockSpec((block_s, d_model), lambda i: (i, 0)),
        ),
        compiler_params=pltpu.CompilerParams(
            dimension_semantics=("parallel",),
            vmem_limit_bytes=48 * 1024 * 1024,
        ),
        input_output_aliases={0: 0},   # in-place add: x buffer reused for the output
    )(x, table)


def _reference(x: jax.Array) -> jax.Array:
    # Pure-JAX reference mirroring the PyTorch __init__ + forward.
    seq_len, d_model = x.shape
    position = jnp.arange(seq_len, dtype=jnp.float32)[:, None]
    div_term = jnp.exp(jnp.arange(0, d_model, 2, dtype=jnp.float32)
                       * (-math.log(10000.0) / d_model))
    enc = jnp.zeros((seq_len, d_model), jnp.float32)
    enc = enc.at[:, 0::2].set(jnp.sin(position * div_term))
    enc = enc.at[:, 1::2].set(jnp.cos(position * div_term))
    return (x.astype(jnp.float32) + enc).astype(x.dtype)


if __name__ == "__main__":
    key = jax.random.PRNGKey(0)

    # Small shape consistent with forward(x: [seq_len, d_model]).
    seq_len, d_model = 8, 32
    x = jax.random.normal(key, (seq_len, d_model), dtype=jnp.float32)

    out = jax.block_until_ready(position_encoding(x))
    ref = _reference(x)
    assert out.shape == ref.shape and out.dtype == ref.dtype
    assert jnp.allclose(out, ref, atol=1e-5, rtol=1e-5), "mismatch vs reference (small case)"

    # Second small check: lane-dense d_model (128) and multiple grid steps (tests the
    # per-tile position offset path).
    x2 = jax.random.normal(jax.random.PRNGKey(1), (48, 128), dtype=jnp.float32)
    out2 = jax.block_until_ready(position_encoding(x2, block_s=16))
    assert jnp.allclose(out2, _reference(x2), atol=1e-5, rtol=1e-5), "mismatch vs reference (tiled case)"

    print("KERNEL_OK")
</pallas_src>

<mosaic_0001>
module attributes {stable_mosaic.version = 11 : i64} {
  func.func @_pos_enc_kernel(%arg0: i32, %arg1: memref<8x32xf32, #tpu.memory_space<vmem>>, %arg2: memref<2x32xf32, #tpu.memory_space<vmem>>, %arg3: memref<8x32xf32, #tpu.memory_space<vmem>>) attributes {dimension_semantics = [#tpu.dimension_semantics<parallel>], iteration_bounds = array<i64: 1>, scalar_prefetch = 0 : i64, scratch_operands = 0 : i64, tpu.core_type = #tpu.core_type<tc>, window_params = [{transform_indices = @transform_0, window_bounds = array<i64: 8, 32>}, {pipeline_mode = #tpu.pipeline_mode<synchronous>, transform_indices = @transform_1, window_bounds = array<i64: 2, 32>}, {transform_indices = @transform_2, window_bounds = array<i64: 8, 32>}]} {
    %0 = tpu.iota {dimensions = array<i32: 0>} : vector<8x1xi32>
    %c8_i32 = arith.constant 8 : i32
    %1 = arith.muli %arg0, %c8_i32 : i32
    %2 = vector.broadcast %1 : i32 to vector<8x1xi32>
    %3 = arith.addi %0, %2 : vector<8x1xi32>
    %c0 = arith.constant 0 : index
    %c0_0 = arith.constant 0 : index
    %4 = vector.load %arg2[%c0, %c0_0] : memref<2x32xf32, #tpu.memory_space<vmem>>, vector<1x32xf32>
    %c1 = arith.constant 1 : index
    %c0_1 = arith.constant 0 : index
    %5 = vector.load %arg2[%c1, %c0_1] : memref<2x32xf32, #tpu.memory_space<vmem>>, vector<1x32xf32>
    %6 = arith.sitofp %3 : vector<8x1xi32> to vector<8x1xf32>
    %7 = vector.broadcast %6 : vector<8x1xf32> to vector<8x32xf32>
    %8 = vector.broadcast %4 : vector<1x32xf32> to vector<8x32xf32>
    %9 = arith.mulf %7, %8 : vector<8x32xf32>
    %10 = vector.broadcast %5 : vector<1x32xf32> to vector<8x32xf32>
    %11 = arith.addf %9, %10 : vector<8x32xf32>
    %12 = math.sin %11 : vector<8x32xf32>
    %c0_2 = arith.constant 0 : index
    %c0_3 = arith.constant 0 : index
    %13 = vector.load %arg1[%c0_2, %c0_3] : memref<8x32xf32, #tpu.memory_space<vmem>>, vector<8x32xf32>
    %14 = arith.addf %13, %12 : vector<8x32xf32>
    %c0_4 = arith.constant 0 : index
    %c0_5 = arith.constant 0 : index
    %15 = vector.load %arg3[%c0_4, %c0_5] : memref<8x32xf32, #tpu.memory_space<vmem>>, vector<8x32xf32>
    tpu.vector_store %arg3[%c0_4, %c0_5], %14 {strides = array<i32>} : memref<8x32xf32, #tpu.memory_space<vmem>>, vector<8x32xf32>,
    return
  }
  func.func @transform_0(%arg0: i32) -> (i32, i32) {
    %c0_i32 = arith.constant 0 : i32
    %c0_i32_0 = arith.constant 0 : i32
    return %arg0, %c0_i32 : i32, i32
  }
  func.func @transform_1(%arg0: i32) -> (i32, i32) {
    %c0_i32 = arith.constant 0 : i32
    %c0_i32_0 = arith.constant 0 : i32
    %c0_i32_1 = arith.constant 0 : i32
    return %c0_i32, %c0_i32_0 : i32, i32
  }
  func.func @transform_2(%arg0: i32) -> (i32, i32) {
    %c0_i32 = arith.constant 0 : i32
    %c0_i32_0 = arith.constant 0 : i32
    return %arg0, %c0_i32 : i32, i32
  }
}

</mosaic_0001>

<llo_original>
// kernel: tpu_custom_call.1
$region0: #{tpu_custom_call.1}
  #allocation0 [shape = 'u32[]', space=smem, size = 0x4, offset = 0x4, fixed_abs, tag = 'smem constant byte address 0x4 - core index']
  #allocation1 [shape = 'u32[144,128]{1,0:T(1,128)}', space=vmem, size = 0x12000, scoped, tag = 'internal scratch']
  %s0 = inlined_call_operand.hbm [shape: f32[8,32], index: 0, kind: input, shape index: {}, may-alias: {0,2}]
  %s1 = inlined_call_operand.vmem [shape: f32[2,32], index: 1, kind: input, shape index: {}]
  %s2 = inlined_call_operand.hbm [shape: f32[8,32], index: 2, kind: output, shape index: {}, may-alias: {0,2}]
  %s3 = sld [smem:[#allocation0]]
  $region22: #{tpu_custom_call.1} parent=0
    _
  %s5 = ssub.s32 1, %s3
  %s6 = scalar_select 0, %s5, %s3
  $region1: #{tpu_custom_call.1} parent=0
    #allocation2 [shape = 'u8[4096]{0}', space=vmem, size = 0x1000, scoped, tag = 'input window, operand 0, single buffered']
    #allocation3 [shape = 's32[1]{0}', space=sflag, size = 0x4, scoped, tag = 'scoped memory for tpu_custom_call.1']
    #allocation4 [shape = 's32[1]{0}', space=sflag, size = 0x4, scoped, tag = 'scoped memory for tpu_custom_call.1']
    #allocation5 [shape = 'u8[4096]{0}', space=vmem, size = 0x1000, scoped, tag = 'output window, operand 0, single buffered']
    %7 = vsyncpa [#allocation3], 0
    %8 = vsyncpa [#allocation4], 0
    // Predicated region
    $region2: #{tpu_custom_call.1} parent=1 // pred_check
      _
    $region3: #{tpu_custom_call.1} parent=1 // pred_check_branch
      %10 = sbr.rel (0) target = $region5
    $region4: #{tpu_custom_call.1} parent=1 // pred_region
      %s12 = ssub.s32 128, 128
      %13 = vsyncadd [#allocation3], %s12
      %s15 = sshll.u32 [#allocation2], 4
      %s16 = int_to_ptr.vmem [resolvable:$true] %s15
      %18 = dma.hbm_to_vmem [thread:$0]  %s0, 128, %s16, [#allocation3]
    $region5: #{tpu_custom_call.1} parent=1 // pred_fallthru
      _
    // Predicated region
    $region6: #{tpu_custom_call.1} parent=1 // pred_check
      _
    $region7: #{tpu_custom_call.1} parent=1 // pred_check_branch
      %20 = sbr.rel (0) target = $region9
    $region8: #{tpu_custom_call.1} parent=1 // pred_region
      _
    $region9: #{tpu_custom_call.1} parent=1 // pred_fallthru
      _
    // Predicated region
    $region10: #{tpu_custom_call.1} parent=1 // pred_check
      _
    $region11: #{tpu_custom_call.1} parent=1 // pred_check_branch
      %22 = sbr.rel (0) target = $region13
    $region12: #{tpu_custom_call.1} parent=1 // pred_region
      %23 = dma.done [#allocation3], 128
    $region13: #{tpu_custom_call.1} parent=1 // pred_fallthru
      _
    %v24 = vlaneseq
    %v25 = vshrl.u32 %v24, 7
    %s26 = smul.u32 0, 8
    %v27 = vstv %s26
    %v28 = vadd.s32 %v25, %v27
    %v29 = vld [vmem:[%s1] sm:$0x1]
    %v30 = vld [vmem:[%s1 + $0x1] sm:$0x1]
    %v31 = vcvt.s32.f32 %v28
    %v32 = vlaneseq
    %v33 = vshrl.u32 %v32, 7
    %v34 = vsub.s32 0, %v33
    %v35 = vrot.slane %v29, %v34
    %v36 = vmul.f32 %v31, %v35
    %v37 = vlaneseq
    %v38 = vshrl.u32 %v37, 7
    %v39 = vsub.s32 0, %v38
    %v40 = vrot.slane %v30, %v39
    %v41 = vadd.f32 %v36, %v40
    %v42 = vand.u32 2147483647, %v41
    %vm43 = vcmp.le.f32.partialorder %v42, 0.7853982
    %vm44 = vcmp.lt.s32.totalorder %v41, 0
    %v45 = vand.u32 %v41, 2139095040
    %v46 = vshrl.u32 %v45, 23
    %v47 = vsub.s32 %v46, 127
    %v48 = vand.u32 2147483647, %v41
    %v49 = vand.u32 %v48, 8388607
    %v50 = vor.u32 %v49, 8388608
    %v51 = vsub.s32 0, %v50
    %v52 = vadd.s32 %v47, 1
    %vm53 = vcmp.gt.s32.totalorder %v52, 0
    %v54 = vsel %vm53, %v52, 0
    %v55 = vshrl.u32 %v54, 5
    %v56 = vand.u32 %v54, 31
    %v57 = vsub.s32 32, %v56
    %v58 = vshrl.u32 683565275, %v57
    %v59 = vshll.u32 683565275, %v56
    %v60 = vshrl.u32 2475754826, %v57
    %v61 = vor.u32 %v59, %v60
    %v62 = vshll.u32 2475754826, %v56
    %v63 = vshrl.u32 2131351028, %v57
    %v64 = vor.u32 %v62, %v63
    %v65 = vshll.u32 2131351028, %v56
    %v66 = vshrl.u32 2102212464, %v57
    %v67 = vor.u32 %v65, %v66
    %v68 = vshll.u32 2102212464, %v56
    %v69 = vshrl.u32 920167782, %v57
    %v70 = vor.u32 %v68, %v69
    %v71 = vshll.u32 920167782, %v56
    %v72 = vshrl.u32 1326507024, %v57
    %v73 = vor.u32 %v71, %v72
    %vm74 = vcmp.lt.s32.totalorder %v55, 1
    %vm75 = vcmp.lt.s32.totalorder %v55, 2
    %vm76 = vcmp.lt.s32.totalorder %v55, 3
    %vm77 = vcmp.lt.s32.totalorder %v55, 4
    %v78 = vsel %vm74, %v58, %v61
    %v79 = vsel %vm77, %v67, 2102212464
    %v80 = vsel %vm76, %v64, %v79
    %v81 = vsel %vm75, %v78, %v80
    %v82 = vsel %vm74, %v61, %v64
    %v83 = vsel %vm77, %v70, 920167782
    %v84 = vsel %vm76, %v67, %v83
    %v85 = vsel %vm75, %v82, %v84
    %v86 = vsel %vm74, %v64, %v67
    %v87 = vsel %vm77, %v73, 1326507024
    %v88 = vsel %vm76, %v70, %v87
    %v89 = vsel %vm75, %v86, %v88
    %v90 = vshll.u32 %v50, 8
    %v91 = vmul.u32.u64.compose %v90, %v89
    %v92 = vextract.low.u32 %v91
    %v93 = vextract.high.u32 %v91
    %v94 = vmul.u32.u64.compose %v90, %v85
    %v95 = vextract.low.u32 %v94
    %v96 = vextract.high.u32 %v94
    %v97 = vmul.u32 %v90, %v81
    %v98 = vadd.s32 %v93, %v95
    %vm99 = vc.u32 %v93, %v95
    %v100 = vadd.s32 %v96, 1
    %v101 = vsel %vm99, %v100, %v96
    %v102 = vadd.s32 %v97, %v101
    %v103 = vadd.s32 %v102, 536870912
    %v104 = vshrl.u32 %v103, 30
    %v105 = vshll.u32 %v104, 30
    %v106 = vsub.s32 %v102, %v105
    %vm107 = vcmp.lt.s32.totalorder %v106, 0
    %v108 = vsub.s32 0, %v106
    %v109 = vsel %vm107, %v108, %v106
    %v110 = vclz %v109
    %v111 = vsub.s32 %v110, 2
    %vm112 = vcmp.gt.s32.totalorder 0, %v111
    %v113 = vsel %vm112, 0, %v111
    %v114 = vsub.s32 32, %v113
    %v115 = vshll.u32 %v106, %v113
    %v116 = vshrl.u32 %v98, %v114
    %v117 = vor.u32 %v115, %v116
    %v118 = vsub.s32 4294967266, %v113
    %v119 = vadd.s32 %v118, 127
    %v120 = vshll.u32 %v119, 23
    %v121 = vor.u32 4788187, %v120
    %v122 = vand.u32 2147483647, %v121
    %v124 = vcvt.s32.f32 %v117
    %v125 = vmul.f32 %v124, %v122
    %v126 = vxor.u32 %v125, 2147483648
    %v127 = vsel %vm44, %v126, %v125
    %v128 = vsub.s32 4, %v104
    %v129 = vsel %vm44, %v128, %v104
    %v130 = vsel %vm43, %v41, %v127
    %v131 = vsel %vm43, 0, %v129
    %v132 = vcosq.f32.pop %v130
    %v133 = vsinq.f32.pop %v130
    %vm134 = vweird.f32 %v41
    %v135 = vadd.s32 %v131, 3
    %v136 = vand.u32 %v135, 3
    %vm137 = vcmp.lt.s32.totalorder %v136, 2
    %vm138 = vcmp.eq.s32.totalorder %v136, 0
    %v139 = vxor.u32 %v133, 2147483648
    %v140 = vsel %vm138, %v132, %v139
    %vm141 = vcmp.eq.s32.totalorder %v136, 2
    %v142 = vxor.u32 %v132, 2147483648
    %v143 = vsel %vm141, %v142, %v133
    %v144 = vsel %vm137, %v140, %v143
    %v145 = vsel %vm134, nan, %v144
    %v146 = vld [vmem:[#allocation2] sm:$0xff]
    %v147 = vadd.f32 %v146, %v145
    %vm148 = vcmask 261120
    %149 = vst.msk [vmem:[#allocation5] sm:$0xff] %vm148, %v147
    // Predicated region
    $region14: #{tpu_custom_call.1} parent=1 // pred_check
      _
    $region15: #{tpu_custom_call.1} parent=1 // pred_check_branch
      %151 = sbr.rel (0) target = $region17
    $region16: #{tpu_custom_call.1} parent=1 // pred_region
      %s153 = ssub.s32 128, 128
      %154 = vsyncadd [#allocation4], %s153
      %s156 = sshll.u32 [#allocation5], 4
      %s157 = int_to_ptr.vmem [resolvable:$true] %s156
      %159 = dma.vmem_to_hbm [thread:$0]  %s157, 128, %s2, [#allocation4]
    $region17: #{tpu_custom_call.1} parent=1 // pred_fallthru
      _
    // Predicated region
    $region18: #{tpu_custom_call.1} parent=1 // pred_check
      _
    $region19: #{tpu_custom_call.1} parent=1 // pred_check_branch
      %161 = sbr.rel (0) target = $region21
    $region20: #{tpu_custom_call.1} parent=1 // pred_region
      %162 = dma.done [#allocation4], 128
    $region21: #{tpu_custom_call.1} parent=1 // pred_fallthru
      _
    %163 = vsyncpa [#allocation3], 1
    %164 = vsyncpa [#allocation4], 1

</llo_original>
